<compile_context>
chip_gen: v6e
topology: v6e:2x2x1
jax: 0.10.0
libtpu: 0.0.40
codegen_flags: <defaults>
</compile_context>

<pallas_src>
from functools import partial

import jax
import jax.numpy as jnp
from jax.experimental import pallas as pl
from jax.experimental.pallas import tpu as pltpu

_LANE = 128
_TARGET_BLOCK_BYTES = 2 << 20     # ~4096 x 128 f32 per grid step (perf review)
_SPLIT_MIN_BYTES = 256 << 10      # below this one full-extent block is cheapest
_CONV_HW_TILE = 8192              # spatial positions (lanes) per conv grid step
_MXU_MIN_CH = 64                  # below this the conv matmul runs on the VPU


# ---------------------------------------------------------------------------
# Pallas kernel 1: per-leaf EMA lerp, updated in place via input/output alias.
#   ema <- decay * ema + (1 - decay) * model
# The model leaf is read in its native dtype and cast inside the kernel, so
# the wrapper never builds a padded / concatenated "model slab".
# ---------------------------------------------------------------------------
def _ema_lerp_kernel(decay_ref, ema_ref, model_ref, out_ref):
    d = decay_ref[0]
    out_ref[...] = ema_ref[...] * d + model_ref[...].astype(jnp.float32) * (1.0 - d)


def _store_shape(shape):
    """Persistent >=2-D layout for a lerped leaf (cheap reshapes only)."""
    shape = tuple(int(s) for s in shape)
    size = 1
    for s in shape:
        size *= s
    while len(shape) > 2 and shape[0] == 1:      # drop unit dims (near-free)
        shape = shape[1:]
    while len(shape) > 2 and shape[-1] == 1:
        shape = shape[:-1]
    if len(shape) >= 2:
        return shape
    if size >= _LANE and size % _LANE == 0:      # big 1-D leaf -> lane-dense 2-D
        return (size // _LANE, _LANE)
    return (1, max(size, 1))                     # scalars / small vectors


def _pick_leading_tile(store_shape):
    """Leading-dim rows per grid step: <=~2 MiB f32 blocks, >=2 steps if possible."""
    d0 = store_shape[0]
    rest = 1
    for s in store_shape[1:]:
        rest *= s
    row_bytes = rest * 4
    total = d0 * row_bytes
    if total <= _SPLIT_MIN_BYTES or d0 <= 1:
        return d0
    align = 8 if len(store_shape) == 2 else 1    # sublane alignment when 2-D
    max_rows = max(align, min(_TARGET_BLOCK_BYTES // row_bytes, d0 // 2))
    t = (max_rows // align) * align
    while t >= align:
        if t > 0 and d0 % t == 0:
            return t
        t -= align
    # TODO(synk): pathologically indivisible leading dims fall back to one
    # full-extent block; a huge leaf of that kind would need a pad+copy path.
    return d0


def _build_leaf_lerp(store_shape):
    """One pallas_call per leaf layout; the EMA leaf is aliased (in-place)."""
    t0 = _pick_leading_tile(store_shape)
    grid = (store_shape[0] // t0,)
    block = (t0,) + tuple(store_shape[1:])
    nrest = len(store_shape) - 1
    index_map = lambda i: (i,) + (0,) * nrest
    rest = 1
    for s in store_shape[1:]:
        rest *= s
    block_bytes = t0 * rest * 4
    vmem_limit = int(max(32 << 20, 6 * block_bytes + (2 << 20)))
    return pl.pallas_call(
        _ema_lerp_kernel,
        out_shape=jax.ShapeDtypeStruct(store_shape, jnp.float32),
        grid=grid,
        in_specs=[
            pl.BlockSpec(memory_space=pltpu.MemorySpace.SMEM),   # decay scalar
            pl.BlockSpec(block, index_map),                      # ema leaf (f32)
            pl.BlockSpec(block, index_map),                      # model leaf
        ],
        out_specs=pl.BlockSpec(block, index_map),
        input_output_aliases={1: 0},                             # ema in place
        compiler_params=pltpu.CompilerParams(
            dimension_semantics=("parallel",),
            vmem_limit_bytes=vmem_limit),
    )


# ---------------------------------------------------------------------------
# Pallas kernel 2: wrapped model forward = 1x1 conv + bias + ReLU (NCHW).
# Spatial (H*W) positions live on the lane axis; H*W is padded to 128 in the
# wrapper so output stores are lane-dense and unmasked.
# ---------------------------------------------------------------------------
def _conv1x1_relu_kernel(w_ref, b_ref, x_ref, o_ref, *, c_in, use_mxu):
    x = x_ref[0]                                  # (C_in, T)
    if use_mxu:
        y = jnp.dot(w_ref[...], x, preferred_element_type=jnp.float32)
    else:
        # Tiny channel counts: unrolled VPU FMA instead of a <1%-utilized MXU op.
        w = w_ref[...]
        y = w[:, 0:1] * x[0:1, :]
        for c in range(1, c_in):
            y = y + w[:, c:c + 1] * x[c:c + 1, :]
    # TODO(synk): bias is a per-step (C_out,1) lane broadcast; hoist to a
    # pre-broadcast constant only if profiling ever shows broadcast pressure.
    y = y + b_ref[...]
    o_ref[0] = jnp.maximum(y, 0.0).astype(o_ref.dtype)


def conv1x1_relu_forward(params, x_nchw):
    w = params["conv.weight"]             # (C_out, C_in, 1, 1), PyTorch layout
    b = params["conv.bias"]               # (C_out,)
    c_out, c_in = int(w.shape[0]), int(w.shape[1])
    n, c, h, wd = x_nchw.shape
    assert c == c_in
    hw = h * wd
    x3d = x_nchw.reshape(n, c_in, hw).astype(jnp.float32)
    hw_pad = int(_LANE * pl.cdiv(hw, _LANE))
    if hw_pad != hw:
        x3d = jnp.pad(x3d, ((0, 0), (0, 0), (0, hw_pad - hw)))
    hw_tile = min(_CONV_HW_TILE, hw_pad)
    while hw_pad % hw_tile:
        hw_tile -= _LANE
    w2d = w.reshape(c_out, c_in).astype(jnp.float32)
    b2d = b.reshape(c_out, 1).astype(jnp.float32)
    use_mxu = min(c_in, c_out) >= _MXU_MIN_CH
    out3d = pl.pallas_call(
        partial(_conv1x1_relu_kernel, c_in=c_in, use_mxu=use_mxu),
        out_shape=jax.ShapeDtypeStruct((n, c_out, hw_pad), jnp.float32),
        grid=(n, hw_pad // hw_tile),
        in_specs=[
            pl.BlockSpec((c_out, c_in), lambda i, j: (0, 0)),
            pl.BlockSpec((c_out, 1), lambda i, j: (0, 0)),
            pl.BlockSpec((1, c_in, hw_tile), lambda i, j: (i, 0, j)),
        ],
        out_specs=pl.BlockSpec((1, c_out, hw_tile), lambda i, j: (i, 0, j)),
        compiler_params=pltpu.CompilerParams(
            dimension_semantics=("parallel", "parallel"),
            vmem_limit_bytes=32 << 20),
    )(w2d, b2d, x3d)
    if hw_pad != hw:
        out3d = out3d[:, :, :hw]
    return out3d.reshape(n, c_out, h, wd)


# ---------------------------------------------------------------------------
# ModelEmaV3 (JAX / Pallas version)
# ---------------------------------------------------------------------------
class ModelEmaV3:
    def __init__(self, params, buffers, decay, min_decay=0.0, update_after_step=0,
                 use_warmup=False, warmup_gamma=1.0, warmup_power=1.0,
                 exclude_buffers=False):
        self.decay = decay
        self.min_decay = min_decay
        self.update_after_step = update_after_step
        self.use_warmup = use_warmup
        self.warmup_gamma = warmup_gamma
        self.warmup_power = warmup_power
        self.exclude_buffers = exclude_buffers

        params = {k: jnp.asarray(v) for k, v in params.items()}
        buffers = {k: jnp.asarray(v) for k, v in buffers.items()}
        merged = {**params, **buffers}
        self._param_key_set = set(params.keys())

        # Partition state_dict entries: lerped (floating) vs copied.
        self._lerp_keys, self._copy_keys = [], []
        for k, v in merged.items():
            is_buffer = k not in self._param_key_set
            floating = jnp.issubdtype(v.dtype, jnp.floating)
            if floating and not (self.exclude_buffers and is_buffer):
                self._lerp_keys.append(k)
            else:
                self._copy_keys.append(k)

        # Static per-leaf layout + a prebuilt aliased Pallas lerp per leaf.
        self._meta = {}
        for k in self._lerp_keys:
            v = merged[k]
            ss = _store_shape(v.shape)
            self._meta[k] = (tuple(v.shape), v.dtype, ss, _build_leaf_lerp(ss))

        lerp_keys = tuple(self._lerp_keys)
        meta = self._meta

        @partial(jax.jit, donate_argnums=(0,))
        def _update(ema_tree, model_tree, decay_scalar):
            d = jnp.reshape(decay_scalar, (1,)).astype(jnp.float32)
            out = {}
            for k in lerp_keys:
                _, _, ss, call = meta[k]
                out[k] = call(d, ema_tree[k], jnp.reshape(model_tree[k], ss))
            return out

        self._jit_update = _update

        # Persistent EMA state: per-leaf f32 arrays in lerp layout + copied extras.
        self._ema = {k: jnp.reshape(jnp.asarray(merged[k], jnp.float32),
                                    self._meta[k][2])
                     for k in self._lerp_keys}
        self.ema_extra = {k: merged[k] for k in self._copy_keys}
        self._export_cache = None

    # -- decay schedule (pure scalar Python, matches the torch spec) --------
    def get_decay(self, step=None):
        if step is None:
            return self.decay
        step = max(0, step - self.update_after_step - 1)
        if step <= 0:
            return 0.0
        if self.use_warmup:
            decay = 1 - (1 + step / self.warmup_gamma) ** (-self.warmup_power)
            decay = max(min(decay, self.decay), self.min_decay)
        else:
            decay = self.decay
        return decay

    # -- EMA update: one jitted pass of per-leaf aliased Pallas lerps --------
    def update(self, model_params, model_buffers, step=None):
        decay = self.get_decay(step)
        merged_model = {**model_params, **model_buffers}
        if self._lerp_keys:
            model_tree = {k: jnp.asarray(merged_model[k]) for k in self._lerp_keys}
            self._ema = self._jit_update(self._ema, model_tree,
                                         jnp.asarray(decay, jnp.float32))
        for k in self._copy_keys:
            self.ema_extra[k] = jnp.asarray(merged_model[k])
        self._export_cache = None

    def set(self, model_params, model_buffers):
        merged = {**model_params, **model_buffers}
        for k in self._lerp_keys:
            self._ema[k] = jnp.reshape(jnp.asarray(merged[k], jnp.float32),
                                       self._meta[k][2])
        for k in self._copy_keys:
            self.ema_extra[k] = jnp.asarray(merged[k])
        self._export_cache = None

    # -- export: cached; rebuilt only after update()/set() ------------------
    def ema_state(self):
        if self._export_cache is None:
            params, bufs = {}, {}
            for k in self._lerp_keys:
                orig_shape, orig_dtype, _, _ = self._meta[k]
                # jnp.array copies, so exported leaves stay valid even after
                # the underlying EMA buffers are donated by the next update().
                v = jnp.array(jnp.reshape(self._ema[k], orig_shape),
                              dtype=orig_dtype)
                (params if k in self._param_key_set else bufs)[k] = v
            for k, v in self.ema_extra.items():
                (params if k in self._param_key_set else bufs)[k] = v
            self._export_cache = (params, bufs)
        return self._export_cache

    @property
    def ema_params(self):
        return self.ema_state()[0]

    @property
    def ema_buffers(self):
        return self.ema_state()[1]

    # -- forward through the EMA weights (Pallas conv kernel) ---------------
    def forward(self, x):
        return conv1x1_relu_forward(self.ema_params, x)

    __call__ = forward


# ---------------------------------------------------------------------------
if __name__ == "__main__":
    key = jax.random.PRNGKey(0)
    k1, k2, k3 = jax.random.split(key, 3)

    C_IN, C_OUT = 4, 8
    params = {
        "conv.weight": jax.random.normal(k1, (C_OUT, C_IN, 1, 1), jnp.float32) * 0.1,
        "conv.bias": jax.random.normal(k2, (C_OUT,), jnp.float32) * 0.1,
    }
    buffers = {"num_batches_tracked": jnp.array(0, dtype=jnp.int32)}

    ema = ModelEmaV3(params, buffers, decay=0.999, use_warmup=True,
                     warmup_gamma=1.0, warmup_power=0.75, update_after_step=0)

    # A drifted "live" model whose weights the EMA should track.
    model_params = {k: v + 0.05 for k, v in params.items()}
    model_buffers = {"num_batches_tracked": jnp.array(10, dtype=jnp.int32)}

    for step in range(1, 5):
        ema.update(model_params, model_buffers, step=step)

    # Forward through the EMA weights (Pallas conv kernel). Input is NCHW.
    x = jax.random.normal(k3, (2, 4, 16, 16), jnp.float32)
    y = ema(x)
    jax.block_until_ready(y)
    jax.block_until_ready(jax.tree_util.tree_leaves(ema.ema_params))

    # Plain-JAX reference check for both the EMA update and the forward pass.
    ref = {k: jnp.asarray(v, jnp.float32) for k, v in params.items()}
    for step in range(1, 5):
        d = ema.get_decay(step)
        ref = {k: ref[k] * d + model_params[k] * (1.0 - d) for k in ref}
    ema_p = ema.ema_params
    for k in ref:
        assert jnp.allclose(ema_p[k], ref[k], atol=1e-5), k
    assert int(ema.ema_buffers["num_batches_tracked"]) == 10

    w2 = ema_p["conv.weight"].reshape(C_OUT, C_IN)
    y_ref = jnp.maximum(
        jnp.einsum("nchw,oc->nohw", x, w2)
        + ema_p["conv.bias"][None, :, None, None],
        0.0,
    )
    assert jnp.allclose(y, y_ref, atol=1e-4)

    print("KERNEL_OK")
</pallas_src>

<mosaic_0001>
module attributes {stable_mosaic.version = 11 : i64} {
  func.func @_ema_lerp_kernel(%arg0: i32, %arg1: memref<1xf32, #tpu.memory_space<smem>>, %arg2: memref<8x4xf32, #tpu.memory_space<vmem>>, %arg3: memref<8x4xf32, #tpu.memory_space<vmem>>, %arg4: memref<8x4xf32, #tpu.memory_space<vmem>>) attributes {dimension_semantics = [#tpu.dimension_semantics<parallel>], iteration_bounds = array<i64: 1>, scalar_prefetch = 0 : i64, scratch_operands = 0 : i64, tpu.core_type = #tpu.core_type<tc>, window_params = [{transform_indices = @transform_0, window_bounds = array<i64: 1>}, {transform_indices = @transform_1, window_bounds = array<i64: 8, 4>}, {transform_indices = @transform_2, window_bounds = array<i64: 8, 4>}, {transform_indices = @transform_3, window_bounds = array<i64: 8, 4>}]} {
    %c0 = arith.constant 0 : index
    %0 = memref.load %arg1[%c0] : memref<1xf32, #tpu.memory_space<smem>>
    %c0_0 = arith.constant 0 : index
    %c0_1 = arith.constant 0 : index
    %1 = vector.load %arg2[%c0_0, %c0_1] : memref<8x4xf32, #tpu.memory_space<vmem>>, vector<8x4xf32>
    %2 = vector.broadcast %0 : f32 to vector<8x4xf32>
    %3 = arith.mulf %1, %2 : vector<8x4xf32>
    %c0_2 = arith.constant 0 : index
    %c0_3 = arith.constant 0 : index
    %4 = vector.load %arg3[%c0_2, %c0_3] : memref<8x4xf32, #tpu.memory_space<vmem>>, vector<8x4xf32>
    %cst = arith.constant 1.000000e+00 : f32
    %5 = arith.subf %cst, %0 : f32
    %6 = vector.broadcast %5 : f32 to vector<8x4xf32>
    %7 = arith.mulf %4, %6 : vector<8x4xf32>
    %8 = arith.addf %3, %7 : vector<8x4xf32>
    %c0_4 = arith.constant 0 : index
    %c0_5 = arith.constant 0 : index
    %9 = vector.load %arg4[%c0_4, %c0_5] : memref<8x4xf32, #tpu.memory_space<vmem>>, vector<8x4xf32>
    tpu.vector_store %arg4[%c0_4, %c0_5], %8 {strides = array<i32>} : memref<8x4xf32, #tpu.memory_space<vmem>>, vector<8x4xf32>,
    return
  }
  func.func @transform_0(%arg0: i32) -> i32 {
    %c0_i32 = arith.constant 0 : i32
    %c0_i32_0 = arith.constant 0 : i32
    return %c0_i32 : i32
  }
  func.func @transform_1(%arg0: i32) -> (i32, i32) {
    %c0_i32 = arith.constant 0 : i32
    %c0_i32_0 = arith.constant 0 : i32
    return %arg0, %c0_i32 : i32, i32
  }
  func.func @transform_2(%arg0: i32) -> (i32, i32) {
    %c0_i32 = arith.constant 0 : i32
    %c0_i32_0 = arith.constant 0 : i32
    return %arg0, %c0_i32 : i32, i32
  }
  func.func @transform_3(%arg0: i32) -> (i32, i32) {
    %c0_i32 = arith.constant 0 : i32
    %c0_i32_0 = arith.constant 0 : i32
    return %arg0, %c0_i32 : i32, i32
  }
}

module attributes {stable_mosaic.version = 11 : i64} {
  func.func @_ema_lerp_kernel(%arg0: i32, %arg1: memref<1xf32, #tpu.memory_space<smem>>, %arg2: memref<1x8xf32, #tpu.memory_space<vmem>>, %arg3: memref<1x8xf32, #tpu.memory_space<vmem>>, %arg4: memref<1x8xf32, #tpu.memory_space<vmem>>) attributes {dimension_semantics = [#tpu.dimension_semantics<parallel>], iteration_bounds = array<i64: 1>, scalar_prefetch = 0 : i64, scratch_operands = 0 : i64, tpu.core_type = #tpu.core_type<tc>, window_params = [{transform_indices = @transform_0, window_bounds = array<i64: 1>}, {transform_indices = @transform_1, window_bounds = array<i64: 1, 8>}, {transform_indices = @transform_2, window_bounds = array<i64: 1, 8>}, {transform_indices = @transform_3, window_bounds = array<i64: 1, 8>}]} {
    %c0 = arith.constant 0 : index
    %0 = memref.load %arg1[%c0] : memref<1xf32, #tpu.memory_space<smem>>
    %c0_0 = arith.constant 0 : index
    %c0_1 = arith.constant 0 : index
    %1 = vector.load %arg2[%c0_0, %c0_1] : memref<1x8xf32, #tpu.memory_space<vmem>>, vector<1x8xf32>
    %2 = vector.broadcast %0 : f32 to vector<1x8xf32>
    %3 = arith.mulf %1, %2 : vector<1x8xf32>
    %c0_2 = arith.constant 0 : index
    %c0_3 = arith.constant 0 : index
    %4 = vector.load %arg3[%c0_2, %c0_3] : memref<1x8xf32, #tpu.memory_space<vmem>>, vector<1x8xf32>
    %cst = arith.constant 1.000000e+00 : f32
    %5 = arith.subf %cst, %0 : f32
    %6 = vector.broadcast %5 : f32 to vector<1x8xf32>
    %7 = arith.mulf %4, %6 : vector<1x8xf32>
    %8 = arith.addf %3, %7 : vector<1x8xf32>
    %c0_4 = arith.constant 0 : index
    %c0_5 = arith.constant 0 : index
    %9 = vector.load %arg4[%c0_4, %c0_5] : memref<1x8xf32, #tpu.memory_space<vmem>>, vector<1x8xf32>
    tpu.vector_store %arg4[%c0_4, %c0_5], %8 {strides = array<i32>} : memref<1x8xf32, #tpu.memory_space<vmem>>, vector<1x8xf32>,
    return
  }
  func.func @transform_0(%arg0: i32) -> i32 {
    %c0_i32 = arith.constant 0 : i32
    %c0_i32_0 = arith.constant 0 : i32
    return %c0_i32 : i32
  }
  func.func @transform_1(%arg0: i32) -> (i32, i32) {
    %c0_i32 = arith.constant 0 : i32
    %c0_i32_0 = arith.constant 0 : i32
    return %arg0, %c0_i32 : i32, i32
  }
  func.func @transform_2(%arg0: i32) -> (i32, i32) {
    %c0_i32 = arith.constant 0 : i32
    %c0_i32_0 = arith.constant 0 : i32
    return %arg0, %c0_i32 : i32, i32
  }
  func.func @transform_3(%arg0: i32) -> (i32, i32) {
    %c0_i32 = arith.constant 0 : i32
    %c0_i32_0 = arith.constant 0 : i32
    return %arg0, %c0_i32 : i32, i32
  }
}

</mosaic_0001>

<llo_original>
// kernel: _update.2
$region0: #{_update.2}
  #allocation0 [shape = 'u32[]', space=smem, size = 0x4, offset = 0x4, fixed_abs, tag = 'smem constant byte address 0x4 - core index']
  #allocation1 [shape = 'u32[144,128]{1,0:T(1,128)}', space=vmem, size = 0x12000, scoped, tag = 'internal scratch']
  #allocation2 [shape = 'f32[1]{0:T(128)S(6)}', space=smem, size = 0x200, scoped, tag = 'scoped memory for _update.2']
  %s0 = inlined_call_operand.<no memory space> [shape: f32[1], index: 0, kind: input, shape index: {}]
  %s1 = inlined_call_operand.vmem [shape: f32[8,4], index: 1, kind: input, shape index: {}, may-alias: {1,3}]
  %s2 = inlined_call_operand.vmem [shape: f32[8,4], index: 2, kind: input, shape index: {}]
  %s3 = inlined_call_operand.vmem [shape: f32[8,4], index: 3, kind: output, shape index: {}, may-alias: {1,3}]
  %s4 = sld [smem:[#allocation0]]
  $region22: #{_update.2} parent=0
    _
  %s6 = ssub.s32 1, %s4
  %s7 = scalar_select 0, %s6, %s4
  %8 = sst [smem:[#allocation2]] %s0
  // Predicated region
  $region2: #{_update.2} parent=0 // pred_check
    _
  $region3: #{_update.2} parent=0 // pred_check_branch
    %10 = sbr.rel (0) target = $region5
  $region4: #{_update.2} parent=0 // pred_region
    _
  $region5: #{_update.2} parent=0 // pred_fallthru
    _
  // Predicated region
  $region6: #{_update.2} parent=0 // pred_check
    _
  $region7: #{_update.2} parent=0 // pred_check_branch
    %12 = sbr.rel (0) target = $region9
  $region8: #{_update.2} parent=0 // pred_region
    _
  $region9: #{_update.2} parent=0 // pred_fallthru
    _
  // Predicated region
  $region10: #{_update.2} parent=0 // pred_check
    _
  $region11: #{_update.2} parent=0 // pred_check_branch
    %14 = sbr.rel (0) target = $region13
  $region12: #{_update.2} parent=0 // pred_region
    _
  $region13: #{_update.2} parent=0 // pred_fallthru
    _
  %s15 = sld [smem:[#allocation2]]
  %v16 = vld [vmem:[%s1] sm:$0xff]
  %v17 = vstv %s15
  %v18 = vmul.f32 %v16, %v17
  %v19 = vld [vmem:[%s2] sm:$0xff]
  %s20 = ssub.f32 1.0, %s15
  %v21 = vstv %s20
  %v22 = vmul.f32 %v19, %v21
  %v23 = vadd.f32 %v18, %v22
  %vm24 = vcmask 31744
  %25 = vst.msk [vmem:[%s3] sm:$0xff] %vm24, %v23
  // Predicated region
  $region14: #{_update.2} parent=0 // pred_check
    _
  $region15: #{_update.2} parent=0 // pred_check_branch
    %27 = sbr.rel (0) target = $region17
  $region16: #{_update.2} parent=0 // pred_region
    _
  $region17: #{_update.2} parent=0 // pred_fallthru
    _
  // Predicated region
  $region18: #{_update.2} parent=0 // pred_check
    _
  $region19: #{_update.2} parent=0 // pred_check_branch
    %29 = sbr.rel (0) target = $region21
  $region20: #{_update.2} parent=0 // pred_region
    _
  $region21: #{_update.2} parent=0 // pred_fallthru
    _

// kernel: _update.3
$region0: #{_update.3}
  #allocation0 [shape = 'u32[]', space=smem, size = 0x4, offset = 0x4, fixed_abs, tag = 'smem constant byte address 0x4 - core index']
  #allocation1 [shape = 'u32[144,128]{1,0:T(1,128)}', space=vmem, size = 0x12000, scoped, tag = 'internal scratch']
  #allocation2 [shape = 'f32[1]{0:T(128)S(6)}', space=smem, size = 0x200, scoped, tag = 'scoped memory for _update.3']
  %s0 = inlined_call_operand.<no memory space> [shape: f32[1], index: 0, kind: input, shape index: {}]
  %s1 = inlined_call_operand.vmem [shape: f32[1,8], index: 1, kind: input, shape index: {}, may-alias: {1,3}]
  %s2 = inlined_call_operand.vmem [shape: f32[1,8], index: 2, kind: input, shape index: {}]
  %s3 = inlined_call_operand.vmem [shape: f32[1,8], index: 3, kind: output, shape index: {}, may-alias: {1,3}]
  %s4 = sld [smem:[#allocation0]]
  $region22: #{_update.3} parent=0
    _
  %s6 = ssub.s32 1, %s4
  %s7 = scalar_select 0, %s6, %s4
  %8 = sst [smem:[#allocation2]] %s0
  // Predicated region
  $region2: #{_update.3} parent=0 // pred_check
    _
  $region3: #{_update.3} parent=0 // pred_check_branch
    %10 = sbr.rel (0) target = $region5
  $region4: #{_update.3} parent=0 // pred_region
    _
  $region5: #{_update.3} parent=0 // pred_fallthru
    _
  // Predicated region
  $region6: #{_update.3} parent=0 // pred_check
    _
  $region7: #{_update.3} parent=0 // pred_check_branch
    %12 = sbr.rel (0) target = $region9
  $region8: #{_update.3} parent=0 // pred_region
    _
  $region9: #{_update.3} parent=0 // pred_fallthru
    _
  // Predicated region
  $region10: #{_update.3} parent=0 // pred_check
    _
  $region11: #{_update.3} parent=0 // pred_check_branch
    %14 = sbr.rel (0) target = $region13
  $region12: #{_update.3} parent=0 // pred_region
    _
  $region13: #{_update.3} parent=0 // pred_fallthru
    _
  %s15 = sld [smem:[#allocation2]]
  %v16 = vld [vmem:[%s1] sm:$0x1]
  %v17 = vstv %s15
  %v18 = vmul.f32 %v16, %v17
  %v19 = vld [vmem:[%s2] sm:$0x1]
  %s20 = ssub.f32 1.0, %s15
  %v21 = vstv %s20
  %v22 = vmul.f32 %v19, %v21
  %v23 = vadd.f32 %v18, %v22
  %vm24 = vcmask 57344
  %25 = vst.msk [vmem:[%s3] sm:$0x1] %vm24, %v23
  // Predicated region
  $region14: #{_update.3} parent=0 // pred_check
    _
  $region15: #{_update.3} parent=0 // pred_check_branch
    %27 = sbr.rel (0) target = $region17
  $region16: #{_update.3} parent=0 // pred_region
    _
  $region17: #{_update.3} parent=0 // pred_fallthru
    _
  // Predicated region
  $region18: #{_update.3} parent=0 // pred_check
    _
  $region19: #{_update.3} parent=0 // pred_check_branch
    %29 = sbr.rel (0) target = $region21
  $region20: #{_update.3} parent=0 // pred_region
    _
  $region21: #{_update.3} parent=0 // pred_fallthru
    _

</llo_original>
